<compile_context>
chip_gen: v7x
topology: tpu7x:2x2x1
jax: 0.10.0
libtpu: 0.0.40
codegen_flags: <defaults>
</compile_context>

<pallas_src>
import jax
import jax.numpy as jnp
from jax.experimental import pallas as pl
from jax.experimental.pallas import tpu as pltpu


def _round_up(x, m):
    return (x + m - 1) // m * m


def mlp_kernel(ids_ref, emb_ref, w1_ref, b1_ref, w23_ref, b23_ref, o_ref):
    tb, seq_len = ids_ref.shape
    vp = emb_ref.shape[0]

    ids = ids_ref[...]                                               # (TB, L) int32
    lane_iota = jax.lax.broadcasted_iota(jnp.int32, (tb, vp), 1)     # (TB, Vp)

    # --- fused embedding gather + mean: build token counts, then MXU matmul ---
    # Static, fully unrolled loop over L: live set stays at one (TB, Vp) buffer
    # instead of a materialized (TB, L, Vp) one-hot.  Compare/accumulate stays
    # f32/int32 (no bf16 VPU on v5e); only the dot() inputs go bf16.
    counts = jnp.zeros((tb, vp), jnp.float32)
    for l in range(seq_len):                                         # L is static
        col = ids[:, l:l + 1]                                        # (TB, 1)
        counts = counts + (col == lane_iota).astype(jnp.float32)

    pooled = jnp.dot(counts.astype(jnp.bfloat16), emb_ref[...],      # bf16 x bf16
                     preferred_element_type=jnp.float32) * (1.0 / seq_len)  # (TB, D)

    # --- Linear(D, 256) + ReLU ---
    h1 = jnp.dot(pooled.astype(jnp.bfloat16), w1_ref[...],
                 preferred_element_type=jnp.float32) + b1_ref[...]   # (TB, 256)
    h1 = jnp.maximum(h1, 0.0)

    # --- folded Linear(256, 64) @ Linear(64, C) -> single (256, Cp) matmul ---
    out = jnp.dot(h1.astype(jnp.bfloat16), w23_ref[...],
                  preferred_element_type=jnp.float32) + b23_ref[...]  # (TB, Cp)
    o_ref[...] = out.astype(o_ref.dtype)                              # lane-dense store


def mlp_forward(ids, emb_table, w1, b1, w2, b2, w3, b3, *, batch_tile=512):
    """ids: (B, L) int token indices in [0, vocab]."""
    B, L = ids.shape
    V, D = emb_table.shape
    C = w3.shape[1]

    # ---- offline folding, lane padding, bf16 weight cast (runs once under jit) ----
    w23 = w2 @ w3                                   # (256, C): no nonlinearity between
    b23 = b2 @ w3 + b3                              # (1, C)
    Vp = _round_up(V, 128)
    Cp = _round_up(C, 128)
    emb_p = jnp.pad(emb_table.astype(jnp.float32),
                    ((0, Vp - V), (0, 0))).astype(jnp.bfloat16)       # (Vp, D) bf16
    w1_b = w1.astype(jnp.bfloat16)                                    # (D, 256) bf16
    w23_p = jnp.pad(w23, ((0, 0), (0, Cp - C))).astype(jnp.bfloat16)  # (256, Cp) bf16
    b1_f = b1.astype(jnp.float32)                                     # biases stay f32
    b23_p = jnp.pad(b23.astype(jnp.float32), ((0, 0), (0, Cp - C)))

    # ---- batch tiling: sublane-aligned, >= 2 grid steps when possible (megacore) ----
    TB = min(batch_tile, _round_up(max(pl.cdiv(B, 2), 1), 8))
    nb = pl.cdiv(B, TB)
    B_pad = nb * TB
    ids_p = jnp.pad(ids.astype(jnp.int32), ((0, B_pad - B), (0, 0)))  # (B_pad, L)

    def resident(arr):
        # Constant-index weight blocks: Pallas skips re-DMA when the block index
        # never changes.  (pipeline_mode=pl.Buffered(1) would also drop the second
        # buffer; irrelevant at this vocab size.)
        return pl.BlockSpec(arr.shape, lambda i: (0,) * arr.ndim)

    cost = pl.CostEstimate(
        flops=2 * B_pad * (Vp * D + D * 256 + 256 * Cp),
        transcendentals=0,
        bytes_accessed=(ids_p.size * 4 + B_pad * Cp * 4
                        + emb_p.size * 2 + w1_b.size * 2 + w23_p.size * 2
                        + b1_f.size * 4 + b23_p.size * 4),
    )

    out = pl.pallas_call(
        mlp_kernel,
        out_shape=jax.ShapeDtypeStruct((B_pad, Cp), jnp.float32),
        grid=(nb,),
        in_specs=[
            pl.BlockSpec((TB, L), lambda i: (i, 0)),   # ids tile (streamed, dense-ish)
            resident(emb_p),                           # embedding table (resident)
            resident(w1_b), resident(b1_f),            # Linear 1
            resident(w23_p), resident(b23_p),          # folded Linear 2+3
        ],
        out_specs=pl.BlockSpec((TB, Cp), lambda i: (i, 0)),
        compiler_params=pltpu.CompilerParams(
            dimension_semantics=("parallel",),         # shard tiles across 2 TCs (v7x)
            vmem_limit_bytes=32 << 20,                 # explicit, fits v5e/v6e/v7x
        ),
        cost_estimate=cost,
    )(ids_p, emb_p, w1_b, b1_f, w23_p, b23_p)

    return out[:B, :C]


def init_params(key, num_classes, vocab_size, embedding_dim=128):
    """Deterministic synthetic parameters matching the PyTorch module's shapes.

    Linear weights are stored transposed as (in_features, out_features);
    biases are (1, out_features) for clean 2D broadcasting on TPU.
    """
    ks = jax.random.split(key, 7)
    V = vocab_size + 1
    D = embedding_dim

    def lin(kw, fan_in, fan_out):
        bound = 1.0 / jnp.sqrt(fan_in)
        return jax.random.uniform(kw, (fan_in, fan_out), jnp.float32, -bound, bound)

    emb_table = jax.random.normal(ks[0], (V, D), jnp.float32)
    w1 = lin(ks[1], D, 256)
    b1 = jax.random.uniform(ks[2], (1, 256), jnp.float32,
                            -1.0 / jnp.sqrt(D), 1.0 / jnp.sqrt(D))
    w2 = lin(ks[3], 256, 64)
    b2 = jax.random.uniform(ks[4], (1, 64), jnp.float32,
                            -1.0 / jnp.sqrt(256), 1.0 / jnp.sqrt(256))
    w3 = lin(ks[5], 64, num_classes)
    b3 = jax.random.uniform(ks[6], (1, num_classes), jnp.float32,
                            -1.0 / jnp.sqrt(64), 1.0 / jnp.sqrt(64))
    return emb_table, w1, b1, w2, b2, w3, b3


def reference_forward(ids, emb_table, w1, b1, w2, b2, w3, b3):
    emb = jnp.take(emb_table, ids, axis=0)      # (B, L, D)
    x = jnp.mean(emb, axis=1)                   # (B, D)
    h = jnp.maximum(x @ w1 + b1, 0.0)
    h = h @ w2 + b2
    return h @ w3 + b3


if __name__ == "__main__":
    num_classes = 8
    vocab_size = 50
    embedding_dim = 128
    B, L = 2, 8

    key = jax.random.PRNGKey(0)
    k_params, k_ids = jax.random.split(key)
    params = init_params(k_params, num_classes, vocab_size, embedding_dim)
    ids = jax.random.randint(k_ids, (B, L), 0, vocab_size + 1, dtype=jnp.int32)

    out = jax.block_until_ready(jax.jit(mlp_forward)(ids, *params))
    ref = reference_forward(ids, *params)

    assert out.shape == (B, num_classes), out.shape
    # bf16 MXU inputs (f32 accumulation) -> loosened tolerance vs. the f32 reference.
    assert jnp.allclose(out, ref, atol=2e-2, rtol=2e-2), "mismatch vs reference"
    print("KERNEL_OK")
</pallas_src>

<mosaic_0001>
module attributes {stable_mosaic.version = 11 : i64} {
  func.func @mlp_kernel(%arg0: i32, %arg1: memref<8x8xi32, #tpu.memory_space<vmem>>, %arg2: memref<128x128xbf16, #tpu.memory_space<vmem>>, %arg3: memref<128x256xbf16, #tpu.memory_space<vmem>>, %arg4: memref<1x256xf32, #tpu.memory_space<vmem>>, %arg5: memref<256x128xbf16, #tpu.memory_space<vmem>>, %arg6: memref<1x128xf32, #tpu.memory_space<vmem>>, %arg7: memref<8x128xf32, #tpu.memory_space<vmem>>) attributes {dimension_semantics = [#tpu.dimension_semantics<parallel>], iteration_bounds = array<i64: 1>, scalar_prefetch = 0 : i64, scratch_operands = 0 : i64, tpu.core_type = #tpu.core_type<tc>, window_params = [{transform_indices = @transform_0, window_bounds = array<i64: 8, 8>}, {pipeline_mode = #tpu.pipeline_mode<synchronous>, transform_indices = @transform_1, window_bounds = array<i64: 128, 128>}, {pipeline_mode = #tpu.pipeline_mode<synchronous>, transform_indices = @transform_2, window_bounds = array<i64: 128, 256>}, {pipeline_mode = #tpu.pipeline_mode<synchronous>, transform_indices = @transform_3, window_bounds = array<i64: 1, 256>}, {pipeline_mode = #tpu.pipeline_mode<synchronous>, transform_indices = @transform_4, window_bounds = array<i64: 256, 128>}, {pipeline_mode = #tpu.pipeline_mode<synchronous>, transform_indices = @transform_5, window_bounds = array<i64: 1, 128>}, {transform_indices = @transform_6, window_bounds = array<i64: 8, 128>}]} {
    %c0 = arith.constant 0 : index
    %c0_0 = arith.constant 0 : index
    %0 = vector.load %arg1[%c0, %c0_0] : memref<8x8xi32, #tpu.memory_space<vmem>>, vector<8x8xi32>
    %1 = tpu.iota {dimensions = array<i32: 1>} : vector<8x128xi32>
    %cst = arith.constant 0.000000e+00 : f32
    %2 = vector.broadcast %cst : f32 to vector<8x128xf32>
    %3 = vector.extract_strided_slice %0 {offsets = [0, 0], sizes = [8, 1], strides = [1, 1]} : vector<8x8xi32> to vector<8x1xi32>
    %4 = vector.broadcast %3 : vector<8x1xi32> to vector<8x128xi32>
    %5 = arith.cmpi eq, %4, %1 : vector<8x128xi32>
    %6 = arith.extui %5 : vector<8x128xi1> to vector<8x128xi32>
    %7 = arith.sitofp %6 : vector<8x128xi32> to vector<8x128xf32>
    %8 = arith.addf %2, %7 : vector<8x128xf32>
    %9 = vector.extract_strided_slice %0 {offsets = [0, 1], sizes = [8, 1], strides = [1, 1]} : vector<8x8xi32> to vector<8x1xi32>
    %10 = vector.broadcast %9 : vector<8x1xi32> to vector<8x128xi32>
    %11 = arith.cmpi eq, %10, %1 : vector<8x128xi32>
    %12 = arith.extui %11 : vector<8x128xi1> to vector<8x128xi32>
    %13 = arith.sitofp %12 : vector<8x128xi32> to vector<8x128xf32>
    %14 = arith.addf %8, %13 : vector<8x128xf32>
    %15 = vector.extract_strided_slice %0 {offsets = [0, 2], sizes = [8, 1], strides = [1, 1]} : vector<8x8xi32> to vector<8x1xi32>
    %16 = vector.broadcast %15 : vector<8x1xi32> to vector<8x128xi32>
    %17 = arith.cmpi eq, %16, %1 : vector<8x128xi32>
    %18 = arith.extui %17 : vector<8x128xi1> to vector<8x128xi32>
    %19 = arith.sitofp %18 : vector<8x128xi32> to vector<8x128xf32>
    %20 = arith.addf %14, %19 : vector<8x128xf32>
    %21 = vector.extract_strided_slice %0 {offsets = [0, 3], sizes = [8, 1], strides = [1, 1]} : vector<8x8xi32> to vector<8x1xi32>
    %22 = vector.broadcast %21 : vector<8x1xi32> to vector<8x128xi32>
    %23 = arith.cmpi eq, %22, %1 : vector<8x128xi32>
    %24 = arith.extui %23 : vector<8x128xi1> to vector<8x128xi32>
    %25 = arith.sitofp %24 : vector<8x128xi32> to vector<8x128xf32>
    %26 = arith.addf %20, %25 : vector<8x128xf32>
    %27 = vector.extract_strided_slice %0 {offsets = [0, 4], sizes = [8, 1], strides = [1, 1]} : vector<8x8xi32> to vector<8x1xi32>
    %28 = vector.broadcast %27 : vector<8x1xi32> to vector<8x128xi32>
    %29 = arith.cmpi eq, %28, %1 : vector<8x128xi32>
    %30 = arith.extui %29 : vector<8x128xi1> to vector<8x128xi32>
    %31 = arith.sitofp %30 : vector<8x128xi32> to vector<8x128xf32>
    %32 = arith.addf %26, %31 : vector<8x128xf32>
    %33 = vector.extract_strided_slice %0 {offsets = [0, 5], sizes = [8, 1], strides = [1, 1]} : vector<8x8xi32> to vector<8x1xi32>
    %34 = vector.broadcast %33 : vector<8x1xi32> to vector<8x128xi32>
    %35 = arith.cmpi eq, %34, %1 : vector<8x128xi32>
    %36 = arith.extui %35 : vector<8x128xi1> to vector<8x128xi32>
    %37 = arith.sitofp %36 : vector<8x128xi32> to vector<8x128xf32>
    %38 = arith.addf %32, %37 : vector<8x128xf32>
    %39 = vector.extract_strided_slice %0 {offsets = [0, 6], sizes = [8, 1], strides = [1, 1]} : vector<8x8xi32> to vector<8x1xi32>
    %40 = vector.broadcast %39 : vector<8x1xi32> to vector<8x128xi32>
    %41 = arith.cmpi eq, %40, %1 : vector<8x128xi32>
    %42 = arith.extui %41 : vector<8x128xi1> to vector<8x128xi32>
    %43 = arith.sitofp %42 : vector<8x128xi32> to vector<8x128xf32>
    %44 = arith.addf %38, %43 : vector<8x128xf32>
    %45 = vector.extract_strided_slice %0 {offsets = [0, 7], sizes = [8, 1], strides = [1, 1]} : vector<8x8xi32> to vector<8x1xi32>
    %46 = vector.broadcast %45 : vector<8x1xi32> to vector<8x128xi32>
    %47 = arith.cmpi eq, %46, %1 : vector<8x128xi32>
    %48 = arith.extui %47 : vector<8x128xi1> to vector<8x128xi32>
    %49 = arith.sitofp %48 : vector<8x128xi32> to vector<8x128xf32>
    %50 = arith.addf %44, %49 : vector<8x128xf32>
    %51 = arith.truncf %50 : vector<8x128xf32> to vector<8x128xbf16>
    %c0_1 = arith.constant 0 : index
    %c0_2 = arith.constant 0 : index
    %52 = vector.load %arg2[%c0_1, %c0_2] : memref<128x128xbf16, #tpu.memory_space<vmem>>, vector<128x128xbf16>
    %cst_3 = arith.constant dense<0.000000e+00> : vector<8x128xf32>
    %53 = tpu.matmul %51, %52, %cst_3 {dimension_numbers = #tpu.dot_dimension_numbers<[1], [0], [0], [1], [0, 0, 1, 1], [], []>} : vector<8x128xbf16>, vector<128x128xbf16>, vector<8x128xf32> -> vector<8x128xf32>
    %cst_4 = arith.constant 1.250000e-01 : f32
    %54 = vector.broadcast %cst_4 : f32 to vector<8x128xf32>
    %55 = arith.mulf %53, %54 : vector<8x128xf32>
    %56 = arith.truncf %55 : vector<8x128xf32> to vector<8x128xbf16>
    %c0_5 = arith.constant 0 : index
    %c0_6 = arith.constant 0 : index
    %57 = vector.load %arg3[%c0_5, %c0_6] : memref<128x256xbf16, #tpu.memory_space<vmem>>, vector<128x256xbf16>
    %cst_7 = arith.constant dense<0.000000e+00> : vector<8x256xf32>
    %58 = tpu.matmul %56, %57, %cst_7 {dimension_numbers = #tpu.dot_dimension_numbers<[1], [0], [0], [1], [0, 0, 1, 1], [], []>} : vector<8x128xbf16>, vector<128x256xbf16>, vector<8x256xf32> -> vector<8x256xf32>
    %c0_8 = arith.constant 0 : index
    %c0_9 = arith.constant 0 : index
    %59 = vector.load %arg4[%c0_8, %c0_9] : memref<1x256xf32, #tpu.memory_space<vmem>>, vector<1x256xf32>
    %60 = vector.broadcast %59 : vector<1x256xf32> to vector<8x256xf32>
    %61 = arith.addf %58, %60 : vector<8x256xf32>
    %cst_10 = arith.constant 0.000000e+00 : f32
    %62 = vector.broadcast %cst_10 : f32 to vector<8x256xf32>
    %63 = arith.maximumf %61, %62 : vector<8x256xf32>
    %64 = arith.truncf %63 : vector<8x256xf32> to vector<8x256xbf16>
    %c0_11 = arith.constant 0 : index
    %c0_12 = arith.constant 0 : index
    %65 = vector.load %arg5[%c0_11, %c0_12] : memref<256x128xbf16, #tpu.memory_space<vmem>>, vector<256x128xbf16>
    %cst_13 = arith.constant dense<0.000000e+00> : vector<8x128xf32>
    %66 = tpu.matmul %64, %65, %cst_13 {dimension_numbers = #tpu.dot_dimension_numbers<[1], [0], [0], [1], [0, 0, 1, 1], [], []>} : vector<8x256xbf16>, vector<256x128xbf16>, vector<8x128xf32> -> vector<8x128xf32>
    %c0_14 = arith.constant 0 : index
    %c0_15 = arith.constant 0 : index
    %67 = vector.load %arg6[%c0_14, %c0_15] : memref<1x128xf32, #tpu.memory_space<vmem>>, vector<1x128xf32>
    %68 = vector.broadcast %67 : vector<1x128xf32> to vector<8x128xf32>
    %69 = arith.addf %66, %68 : vector<8x128xf32>
    %c0_16 = arith.constant 0 : index
    %c0_17 = arith.constant 0 : index
    %70 = vector.load %arg7[%c0_16, %c0_17] : memref<8x128xf32, #tpu.memory_space<vmem>>, vector<8x128xf32>
    tpu.vector_store %arg7[%c0_16, %c0_17], %69 {strides = array<i32>} : memref<8x128xf32, #tpu.memory_space<vmem>>, vector<8x128xf32>,
    return
  }
  func.func @transform_0(%arg0: i32) -> (i32, i32) {
    %c0_i32 = arith.constant 0 : i32
    %c0_i32_0 = arith.constant 0 : i32
    return %arg0, %c0_i32 : i32, i32
  }
  func.func @transform_1(%arg0: i32) -> (i32, i32) {
    %c0_i32 = arith.constant 0 : i32
    %c0_i32_0 = arith.constant 0 : i32
    %c0_i32_1 = arith.constant 0 : i32
    return %c0_i32, %c0_i32_0 : i32, i32
  }
  func.func @transform_2(%arg0: i32) -> (i32, i32) {
    %c0_i32 = arith.constant 0 : i32
    %c0_i32_0 = arith.constant 0 : i32
    %c0_i32_1 = arith.constant 0 : i32
    return %c0_i32, %c0_i32_0 : i32, i32
  }
  func.func @transform_3(%arg0: i32) -> (i32, i32) {
    %c0_i32 = arith.constant 0 : i32
    %c0_i32_0 = arith.constant 0 : i32
    %c0_i32_1 = arith.constant 0 : i32
    return %c0_i32, %c0_i32_0 : i32, i32
  }
  func.func @transform_4(%arg0: i32) -> (i32, i32) {
    %c0_i32 = arith.constant 0 : i32
    %c0_i32_0 = arith.constant 0 : i32
    %c0_i32_1 = arith.constant 0 : i32
    return %c0_i32, %c0_i32_0 : i32, i32
  }
  func.func @transform_5(%arg0: i32) -> (i32, i32) {
    %c0_i32 = arith.constant 0 : i32
    %c0_i32_0 = arith.constant 0 : i32
    %c0_i32_1 = arith.constant 0 : i32
    return %c0_i32, %c0_i32_0 : i32, i32
  }
  func.func @transform_6(%arg0: i32) -> (i32, i32) {
    %c0_i32 = arith.constant 0 : i32
    %c0_i32_0 = arith.constant 0 : i32
    return %arg0, %c0_i32 : i32, i32
  }
}

</mosaic_0001>

<llo_original>
// kernel: mlp_forward.1
$region0: #{mlp_forward.1}
  #allocation0 [shape = 'u32[]', space=smem, size = 0x4, offset = 0x4, fixed_abs, tag = 'smem constant byte address 0x4 - core index']
  #allocation1 [shape = 'u32[144,128]{1,0:T(1,128)}', space=vmem, size = 0x12000, scoped, tag = 'internal scratch']
  %s0 = inlined_call_operand.vmem [shape: s32[8,8], index: 0, kind: input, shape index: {}]
  %s1 = inlined_call_operand.vmem [shape: bf16[128,128], index: 1, kind: input, shape index: {}]
  %s2 = inlined_call_operand.vmem [shape: bf16[128,256], index: 2, kind: input, shape index: {}]
  %s3 = inlined_call_operand.vmem [shape: f32[1,256], index: 3, kind: input, shape index: {}]
  %s4 = inlined_call_operand.vmem [shape: bf16[256,128], index: 4, kind: input, shape index: {}]
  %s5 = inlined_call_operand.vmem [shape: f32[1,128], index: 5, kind: input, shape index: {}]
  %s6 = inlined_call_operand.vmem [shape: f32[8,128], index: 6, kind: output, shape index: {}]
  %s7 = sld [smem:[#allocation0]]
  $region34: #{mlp_forward.1} parent=0
    _
  %s9 = ssub.s32 1, %s7
  %s10 = scalar_select 0, %s9, %s7
  // Predicated region
  $region2: #{mlp_forward.1} parent=0 // pred_check
    _
  $region3: #{mlp_forward.1} parent=0 // pred_check_branch
    %12 = sbr.rel (0) target = $region5
  $region4: #{mlp_forward.1} parent=0 // pred_region
    _
  $region5: #{mlp_forward.1} parent=0 // pred_fallthru
    _
  // Predicated region
  $region6: #{mlp_forward.1} parent=0 // pred_check
    _
  $region7: #{mlp_forward.1} parent=0 // pred_check_branch
    %14 = sbr.rel (0) target = $region9
  $region8: #{mlp_forward.1} parent=0 // pred_region
    _
  $region9: #{mlp_forward.1} parent=0 // pred_fallthru
    _
  // Predicated region
  $region10: #{mlp_forward.1} parent=0 // pred_check
    _
  $region11: #{mlp_forward.1} parent=0 // pred_check_branch
    %16 = sbr.rel (0) target = $region13
  $region12: #{mlp_forward.1} parent=0 // pred_region
    _
  $region13: #{mlp_forward.1} parent=0 // pred_fallthru
    _
  // Predicated region
  $region14: #{mlp_forward.1} parent=0 // pred_check
    _
  $region15: #{mlp_forward.1} parent=0 // pred_check_branch
    %18 = sbr.rel (0) target = $region17
  $region16: #{mlp_forward.1} parent=0 // pred_region
    _
  $region17: #{mlp_forward.1} parent=0 // pred_fallthru
    _
  // Predicated region
  $region18: #{mlp_forward.1} parent=0 // pred_check
    _
  $region19: #{mlp_forward.1} parent=0 // pred_check_branch
    %20 = sbr.rel (0) target = $region21
  $region20: #{mlp_forward.1} parent=0 // pred_region
    _
  $region21: #{mlp_forward.1} parent=0 // pred_fallthru
    _
  // Predicated region
  $region22: #{mlp_forward.1} parent=0 // pred_check
    _
  $region23: #{mlp_forward.1} parent=0 // pred_check_branch
    %22 = sbr.rel (0) target = $region25
  $region24: #{mlp_forward.1} parent=0 // pred_region
    _
  $region25: #{mlp_forward.1} parent=0 // pred_fallthru
    _
  %v24 = vld [vmem:[%s0] sm:$0xff]
  %v25 = vlaneseq
  %v26 = vand.u32 %v25, 127
  %27 = vset.pattern.permute.xlu0 0
  %28 = vperm.xlu0 %27, %v24
  %v29 = vpop.permute.xlu0 %28
  %vm30 = vcmp.eq.s32.totalorder %v29, %v26
  %v31 = vsel %vm30, 1, 0
  %v32 = vcvt.s32.f32 %v31
  %v33 = vadd.f32 %v32, 0.0
  %34 = vset.pattern.permute.xlu0 1
  %35 = vperm.xlu0 %34, %v24
  %v36 = vpop.permute.xlu0 %35
  %vm37 = vcmp.eq.s32.totalorder %v36, %v26
  %v38 = vsel %vm37, 1, 0
  %v39 = vcvt.s32.f32 %v38
  %v40 = vadd.f32 %v33, %v39
  %41 = vset.pattern.permute.xlu0 2
  %42 = vperm.xlu0 %41, %v24
  %v43 = vpop.permute.xlu0 %42
  %vm44 = vcmp.eq.s32.totalorder %v43, %v26
  %v45 = vsel %vm44, 1, 0
  %v46 = vcvt.s32.f32 %v45
  %v47 = vadd.f32 %v40, %v46
  %48 = vset.pattern.permute.xlu0 3
  %49 = vperm.xlu0 %48, %v24
  %v50 = vpop.permute.xlu0 %49
  %vm51 = vcmp.eq.s32.totalorder %v50, %v26
  %v52 = vsel %vm51, 1, 0
  %v53 = vcvt.s32.f32 %v52
  %v54 = vadd.f32 %v47, %v53
  %55 = vset.pattern.permute.xlu0 4
  %56 = vperm.xlu0 %55, %v24
  %v57 = vpop.permute.xlu0 %56
  %vm58 = vcmp.eq.s32.totalorder %v57, %v26
  %v59 = vsel %vm58, 1, 0
  %v60 = vcvt.s32.f32 %v59
  %v61 = vadd.f32 %v54, %v60
  %62 = vset.pattern.permute.xlu0 5
  %63 = vperm.xlu0 %62, %v24
  %v64 = vpop.permute.xlu0 %63
  %vm65 = vcmp.eq.s32.totalorder %v64, %v26
  %v66 = vsel %vm65, 1, 0
  %v67 = vcvt.s32.f32 %v66
  %v68 = vadd.f32 %v61, %v67
  %69 = vset.pattern.permute.xlu0 6
  %70 = vperm.xlu0 %69, %v24
  %v71 = vpop.permute.xlu0 %70
  %vm72 = vcmp.eq.s32.totalorder %v71, %v26
  %v73 = vsel %vm72, 1, 0
  %v74 = vcvt.s32.f32 %v73
  %v75 = vadd.f32 %v68, %v74
  %76 = vset.pattern.permute.xlu0 7
  %77 = vperm.xlu0 %76, %v24
  %v78 = vpop.permute.xlu0 %77
  %vm79 = vcmp.eq.s32.totalorder %v78, %v26
  %v80 = vsel %vm79, 1, 0
  %v81 = vcvt.s32.f32 %v80
  %v82 = vadd.f32 %v75, %v81
  %v83 = vpack.c.bf16 %v82, %v82
  %v84 = vld [vmem:[%s1] sm:$0xf]
  %v85 = vld [vmem:[%s1 + $0x4] sm:$0xf]
  %v86 = vld [vmem:[%s1 + $0x8] sm:$0xf]
  %v87 = vld [vmem:[%s1 + $0xc] sm:$0xf]
  %v88 = vld [vmem:[%s1 + $0x10] sm:$0xf]
  %v89 = vld [vmem:[%s1 + $0x14] sm:$0xf]
  %v90 = vld [vmem:[%s1 + $0x18] sm:$0xf]
  %v91 = vld [vmem:[%s1 + $0x1c] sm:$0xf]
  %v92 = vld [vmem:[%s1 + $0x20] sm:$0xf]
  %v93 = vld [vmem:[%s1 + $0x24] sm:$0xf]
  %v94 = vld [vmem:[%s1 + $0x28] sm:$0xf]
  %v95 = vld [vmem:[%s1 + $0x2c] sm:$0xf]
  %v96 = vld [vmem:[%s1 + $0x30] sm:$0xf]
  %v97 = vld [vmem:[%s1 + $0x34] sm:$0xf]
  %v98 = vld [vmem:[%s1 + $0x38] sm:$0xf]
  %v99 = vld [vmem:[%s1 + $0x3c] sm:$0xf]
  %v116 = vunpack.c.l.b16 %v84
  %v117 = vunpack.c.l.b16 %v85
  %v118 = vunpack.c.l.b16 %v86
  %v119 = vunpack.c.l.b16 %v87
  %v120 = vunpack.c.l.b16 %v88
  %v121 = vunpack.c.l.b16 %v89
  %v122 = vunpack.c.l.b16 %v90
  %v123 = vunpack.c.l.b16 %v91
  %v124 = vunpack.c.l.b16 %v92
  %v125 = vunpack.c.l.b16 %v93
  %v126 = vunpack.c.l.b16 %v94
  %v127 = vunpack.c.l.b16 %v95
  %v128 = vunpack.c.l.b16 %v96
  %v129 = vunpack.c.l.b16 %v97
  %v130 = vunpack.c.l.b16 %v98
  %v131 = vunpack.c.l.b16 %v99
  %v132 = vpack.c.b16 %v117, %v116
  %v133 = vpack.c.b16 %v119, %v118
  %v134 = vpack.c.b16 %v121, %v120
  %v135 = vpack.c.b16 %v123, %v122
  %v136 = vpack.c.b16 %v125, %v124
  %v137 = vpack.c.b16 %v127, %v126
  %v138 = vpack.c.b16 %v129, %v128
  %v139 = vpack.c.b16 %v131, %v130
  %148 = vmatprep.subr.bf16.mxu0 0
  %149 = vmatpush1.bf16.msra.mxu0 %v132
  %150 = vmatprep.subr.bf16.mxu0 0
  %151 = vmatpush1.bf16.msra.mxu0 %v133
  %152 = vmatprep.subr.bf16.mxu0 0
  %153 = vmatpush1.bf16.msra.mxu0 %v134
  %154 = vmatprep.subr.bf16.mxu0 0
  %155 = vmatpush1.bf16.msra.mxu0 %v135
  %156 = vmatprep.subr.bf16.mxu0 0
  %157 = vmatpush1.bf16.msra.mxu0 %v136
  %158 = vmatprep.subr.bf16.mxu0 0
  %159 = vmatpush1.bf16.msra.mxu0 %v137
  %160 = vmatprep.subr.bf16.mxu0 0
  %161 = vmatpush1.bf16.msra.mxu0 %v138
  %162 = vmatprep.subr.bf16.mxu0 0
  %163 = vmatpush1.bf16.msra.mxu0 %v139
  %164 = vmatprep.subr.bf16.mxu0 0
  %165 = vmatpush1.bf16.msra.mxu0 0
  %166 = vmatprep.subr.bf16.mxu0 0
  %167 = vmatpush1.bf16.msra.mxu0 0
  %168 = vmatprep.subr.bf16.mxu0 0
  %169 = vmatpush1.bf16.msra.mxu0 0
  %170 = vmatprep.subr.bf16.mxu0 0
  %171 = vmatpush1.bf16.msra.mxu0 0
  %172 = vmatprep.subr.bf16.mxu0 0
  %173 = vmatpush1.bf16.msra.mxu0 0
  %174 = vmatprep.subr.bf16.mxu0 0
  %175 = vmatpush1.bf16.msra.mxu0 0
  %176 = vmatprep.subr.bf16.mxu0 0
  %177 = vmatpush1.bf16.msra.mxu0 0
  %178 = vmatprep.subr.bf16.mxu0 0
  %179 = vmatpush1.bf16.msra.mxu0 0
  %180 = vmatprep.mubr.bf16.mxu0 0
  %181 = vmatmul.mubr.bf16.gmra.mrb[0].mxu0 %v83
  %v182 = vpop.f32.mrb[0].mxu0
  %v183 = vadd.f32 0.0, %v182
  %v184 = vpop.f32.mrb[0].mxu0
  %v185 = vpop.f32.mrb[0].mxu0
  %v186 = vpop.f32.mrb[0].mxu0
  %187 = vdwg.mxu0
  %v188 = vmul.f32 %v183, 0.125
  %v189 = vpack.c.bf16 %v188, %v188
  %v190 = vld [vmem:[%s2] sm:$0xff]
  %v191 = vld [vmem:[%s2 + $0x8] sm:$0xff]
  %v192 = vld [vmem:[%s2 + $0x10] sm:$0xff]
  %v193 = vld [vmem:[%s2 + $0x18] sm:$0xff]
  %v194 = vld [vmem:[%s2 + $0x20] sm:$0xff]
  %v195 = vld [vmem:[%s2 + $0x28] sm:$0xff]
  %v196 = vld [vmem:[%s2 + $0x30] sm:$0xff]
  %v197 = vld [vmem:[%s2 + $0x38] sm:$0xff]
  %v198 = vld [vmem:[%s2 + $0x40] sm:$0xff]
  %v199 = vld [vmem:[%s2 + $0x48] sm:$0xff]
  %v200 = vld [vmem:[%s2 + $0x50] sm:$0xff]
  %v201 = vld [vmem:[%s2 + $0x58] sm:$0xff]
  %v202 = vld [vmem:[%s2 + $0x60] sm:$0xff]
  %v203 = vld [vmem:[%s2 + $0x68] sm:$0xff]
  %v204 = vld [vmem:[%s2 + $0x70] sm:$0xff]
  %v205 = vld [vmem:[%s2 + $0x78] sm:$0xff]
  %v206 = vld [vmem:[%s3] sm:$0x3]
  %v208 = vlaneseq
  %v209 = vshrl.u32 %v208, 7
  %v210 = vsub.s32 0, %v209
  %v211 = vrot.slane %v206, %v210
  %v212 = vlaneseq
  %v213 = vshrl.u32 %v212, 7
  %v214 = vsub.s32 1, %v213
  %v215 = vrot.slane %v206, %v214
  %v234 = vunpack.c.l.b16 %v190
  %v235 = vunpack.c.h.b16 %v190
  %v236 = vunpack.c.l.b16 %v191
  %v237 = vunpack.c.h.b16 %v191
  %v238 = vunpack.c.l.b16 %v192
  %v239 = vunpack.c.h.b16 %v192
  %v240 = vunpack.c.l.b16 %v193
  %v241 = vunpack.c.h.b16 %v193
  %v242 = vunpack.c.l.b16 %v194
  %v243 = vunpack.c.h.b16 %v194
  %v244 = vunpack.c.l.b16 %v195
  %v245 = vunpack.c.h.b16 %v195
  %v246 = vunpack.c.l.b16 %v196
  %v247 = vunpack.c.h.b16 %v196
  %v248 = vunpack.c.l.b16 %v197
  %v249 = vunpack.c.h.b16 %v197
  %v250 = vunpack.c.l.b16 %v198
  %v251 = vunpack.c.h.b16 %v198
  %v252 = vunpack.c.l.b16 %v199
  %v253 = vunpack.c.h.b16 %v199
  %v254 = vunpack.c.l.b16 %v200
  %v255 = vunpack.c.h.b16 %v200
  %v256 = vunpack.c.l.b16 %v201
  %v257 = vunpack.c.h.b16 %v201
  %v258 = vunpack.c.l.b16 %v202
  %v259 = vunpack.c.h.b16 %v202
  %v260 = vunpack.c.l.b16 %v203
  %v261 = vunpack.c.h.b16 %v203
  %v262 = vunpack.c.l.b16 %v204
  %v263 = vunpack.c.h.b16 %v204
  %v264 = vunpack.c.l.b16 %v205
  %v265 = vunpack.c.h.b16 %v205
  %v266 = vpack.c.b16 %v236, %v234
  %v267 = vpack.c.b16 %v237, %v235
  %v268 = vpack.c.b16 %v240, %v238
  %v269 = vpack.c.b16 %v241, %v239
  %v270 = vpack.c.b16 %v244, %v242
  %v271 = vpack.c.b16 %v245, %v243
  %v272 = vpack.c.b16 %v248, %v246
  %v273 = vpack.c.b16 %v249, %v247
  %v274 = vpack.c.b16 %v252, %v250
  %v275 = vpack.c.b16 %v253, %v251
  %v276 = vpack.c.b16 %v256, %v254
  %v277 = vpack.c.b16 %v257, %v255
  %v278 = vpack.c.b16 %v260, %v258
  %v279 = vpack.c.b16 %v261, %v259
  %v280 = vpack.c.b16 %v264, %v262
  %v281 = vpack.c.b16 %v265, %v263
  %298 = vmatprep.subr.bf16.mxu0 %v267
  %299 = vmatpush1.bf16.msra.mxu0 %v266
  %300 = vmatprep.subr.bf16.mxu0 %v269
  %301 = vmatpush1.bf16.msra.mxu0 %v268
  %302 = vmatprep.subr.bf16.mxu0 %v271
  %303 = vmatpush1.bf16.msra.mxu0 %v270
  %304 = vmatprep.subr.bf16.mxu0 %v273
  %305 = vmatpush1.bf16.msra.mxu0 %v272
  %306 = vmatprep.subr.bf16.mxu0 %v275
  %307 = vmatpush1.bf16.msra.mxu0 %v274
  %308 = vmatprep.subr.bf16.mxu0 %v277
  %309 = vmatpush1.bf16.msra.mxu0 %v276
  %310 = vmatprep.subr.bf16.mxu0 %v279
  %311 = vmatpush1.bf16.msra.mxu0 %v278
  %312 = vmatprep.subr.bf16.mxu0 %v281
  %313 = vmatpush1.bf16.msra.mxu0 %v280
  %314 = vmatprep.subr.bf16.mxu0 0
  %315 = vmatpush1.bf16.msra.mxu0 0
  %316 = vmatprep.subr.bf16.mxu0 0
  %317 = vmatpush1.bf16.msra.mxu0 0
  %318 = vmatprep.subr.bf16.mxu0 0
  %319 = vmatpush1.bf16.msra.mxu0 0
  %320 = vmatprep.subr.bf16.mxu0 0
  %321 = vmatpush1.bf16.msra.mxu0 0
  %322 = vmatprep.subr.bf16.mxu0 0
  %323 = vmatpush1.bf16.msra.mxu0 0
  %324 = vmatprep.subr.bf16.mxu0 0
  %325 = vmatpush1.bf16.msra.mxu0 0
  %326 = vmatprep.subr.bf16.mxu0 0
  %327 = vmatpush1.bf16.msra.mxu0 0
  %328 = vmatprep.subr.bf16.mxu0 0
  %329 = vmatpush1.bf16.msra.mxu0 0
  %330 = vmatprep.mubr.bf16.mxu0 0
  %331 = vmatmul.mubr.bf16.gmra.mrb[0].mxu0 %v189
  %v332 = vpop.f32.mrb[0].mxu0
  %v333 = vadd.f32 %v211, %v332
  %v334 = vpop.f32.mrb[0].mxu0
  %v335 = vadd.f32 %v215, %v334
  %v336 = vpop.f32.mrb[0].mxu0
  %v337 = vpop.f32.mrb[0].mxu0
  %338 = vdwg.mxu0
  %v339 = vmax.f32 %v333, 0.0
  %v340 = vmax.f32 %v335, 0.0
  %v341 = vpack.c.bf16 %v339, %v339
  %v342 = vpack.c.bf16 %v340, %v340
  %v343 = vld [vmem:[%s4] sm:$0xf]
  %v344 = vld [vmem:[%s4 + $0x4] sm:$0xf]
  %v345 = vld [vmem:[%s4 + $0x8] sm:$0xf]
  %v346 = vld [vmem:[%s4 + $0xc] sm:$0xf]
  %v347 = vld [vmem:[%s4 + $0x10] sm:$0xf]
  %v348 = vld [vmem:[%s4 + $0x14] sm:$0xf]
  %v349 = vld [vmem:[%s4 + $0x18] sm:$0xf]
  %v350 = vld [vmem:[%s4 + $0x1c] sm:$0xf]
  %v351 = vld [vmem:[%s4 + $0x20] sm:$0xf]
  %v352 = vld [vmem:[%s4 + $0x24] sm:$0xf]
  %v353 = vld [vmem:[%s4 + $0x28] sm:$0xf]
  %v354 = vld [vmem:[%s4 + $0x2c] sm:$0xf]
  %v355 = vld [vmem:[%s4 + $0x30] sm:$0xf]
  %v356 = vld [vmem:[%s4 + $0x34] sm:$0xf]
  %v357 = vld [vmem:[%s4 + $0x38] sm:$0xf]
  %v358 = vld [vmem:[%s4 + $0x3c] sm:$0xf]
  %v359 = vld [vmem:[%s4 + $0x40] sm:$0xf]
  %v360 = vld [vmem:[%s4 + $0x44] sm:$0xf]
  %v361 = vld [vmem:[%s4 + $0x48] sm:$0xf]
  %v362 = vld [vmem:[%s4 + $0x4c] sm:$0xf]
  %v363 = vld [vmem:[%s4 + $0x50] sm:$0xf]
  %v364 = vld [vmem:[%s4 + $0x54] sm:$0xf]
  %v365 = vld [vmem:[%s4 + $0x58] sm:$0xf]
  %v366 = vld [vmem:[%s4 + $0x5c] sm:$0xf]
  %v367 = vld [vmem:[%s4 + $0x60] sm:$0xf]
  %v368 = vld [vmem:[%s4 + $0x64] sm:$0xf]
  %v369 = vld [vmem:[%s4 + $0x68] sm:$0xf]
  %v370 = vld [vmem:[%s4 + $0x6c] sm:$0xf]
  %v371 = vld [vmem:[%s4 + $0x70] sm:$0xf]
  %v372 = vld [vmem:[%s4 + $0x74] sm:$0xf]
  %v373 = vld [vmem:[%s4 + $0x78] sm:$0xf]
  %v374 = vld [vmem:[%s4 + $0x7c] sm:$0xf]
  %v375 = vld [vmem:[%s5] sm:$0x1]
  %v377 = vlaneseq
  %v378 = vshrl.u32 %v377, 7
  %v379 = vsub.s32 0, %v378
  %v380 = vrot.slane %v375, %v379
  %v414 = vunpack.c.l.b16 %v343
  %v415 = vunpack.c.l.b16 %v344
  %v416 = vunpack.c.l.b16 %v345
  %v417 = vunpack.c.l.b16 %v346
  %v418 = vunpack.c.l.b16 %v347
  %v419 = vunpack.c.l.b16 %v348
  %v420 = vunpack.c.l.b16 %v349
  %v421 = vunpack.c.l.b16 %v350
  %v422 = vunpack.c.l.b16 %v351
  %v423 = vunpack.c.l.b16 %v352
  %v424 = vunpack.c.l.b16 %v353
  %v425 = vunpack.c.l.b16 %v354
  %v426 = vunpack.c.l.b16 %v355
  %v427 = vunpack.c.l.b16 %v356
  %v428 = vunpack.c.l.b16 %v357
  %v429 = vunpack.c.l.b16 %v358
  %v430 = vunpack.c.l.b16 %v359
  %v431 = vunpack.c.l.b16 %v360
  %v432 = vunpack.c.l.b16 %v361
  %v433 = vunpack.c.l.b16 %v362
  %v434 = vunpack.c.l.b16 %v363
  %v435 = vunpack.c.l.b16 %v364
  %v436 = vunpack.c.l.b16 %v365
  %v437 = vunpack.c.l.b16 %v366
  %v438 = vunpack.c.l.b16 %v367
  %v439 = vunpack.c.l.b16 %v368
  %v440 = vunpack.c.l.b16 %v369
  %v441 = vunpack.c.l.b16 %v370
  %v442 = vunpack.c.l.b16 %v371
  %v443 = vunpack.c.l.b16 %v372
  %v444 = vunpack.c.l.b16 %v373
  %v445 = vunpack.c.l.b16 %v374
  %v446 = vpack.c.b16 %v415, %v414
  %v447 = vpack.c.b16 %v417, %v416
  %v448 = vpack.c.b16 %v419, %v418
  %v449 = vpack.c.b16 %v421, %v420
  %v450 = vpack.c.b16 %v423, %v422
  %v451 = vpack.c.b16 %v425, %v424
  %v452 = vpack.c.b16 %v427, %v426
  %v453 = vpack.c.b16 %v429, %v428
  %v454 = vpack.c.b16 %v431, %v430
  %v455 = vpack.c.b16 %v433, %v432
  %v456 = vpack.c.b16 %v435, %v434
  %v457 = vpack.c.b16 %v437, %v436
  %v458 = vpack.c.b16 %v439, %v438
  %v459 = vpack.c.b16 %v441, %v440
  %v460 = vpack.c.b16 %v443, %v442
  %v461 = vpack.c.b16 %v445, %v444
  %478 = vmatprep.subr.bf16.mxu0 0
  %479 = vmatpush1.bf16.msra.mxu0 %v446
  %480 = vmatprep.subr.bf16.mxu0 0
  %481 = vmatpush1.bf16.msra.mxu0 %v447
  %482 = vmatprep.subr.bf16.mxu0 0
  %483 = vmatpush1.bf16.msra.mxu0 %v448
  %484 = vmatprep.subr.bf16.mxu0 0
  %485 = vmatpush1.bf16.msra.mxu0 %v449
  %486 = vmatprep.subr.bf16.mxu0 0
  %487 = vmatpush1.bf16.msra.mxu0 %v450
  %488 = vmatprep.subr.bf16.mxu0 0
  %489 = vmatpush1.bf16.msra.mxu0 %v451
  %490 = vmatprep.subr.bf16.mxu0 0
  %491 = vmatpush1.bf16.msra.mxu0 %v452
  %492 = vmatprep.subr.bf16.mxu0 0
  %493 = vmatpush1.bf16.msra.mxu0 %v453
  %494 = vmatprep.subr.bf16.mxu0 0
  %495 = vmatpush1.bf16.msra.mxu0 %v454
  %496 = vmatprep.subr.bf16.mxu0 0
  %497 = vmatpush1.bf16.msra.mxu0 %v455
  %498 = vmatprep.subr.bf16.mxu0 0
  %499 = vmatpush1.bf16.msra.mxu0 %v456
  %500 = vmatprep.subr.bf16.mxu0 0
  %501 = vmatpush1.bf16.msra.mxu0 %v457
  %502 = vmatprep.subr.bf16.mxu0 0
  %503 = vmatpush1.bf16.msra.mxu0 %v458
  %504 = vmatprep.subr.bf16.mxu0 0
  %505 = vmatpush1.bf16.msra.mxu0 %v459
  %506 = vmatprep.subr.bf16.mxu0 0
  %507 = vmatpush1.bf16.msra.mxu0 %v460
  %508 = vmatprep.subr.bf16.mxu0 0
  %509 = vmatpush1.bf16.msra.mxu0 %v461
  %510 = vmatprep.mubr.bf16.mxu0 %v342
  %511 = vmatmul.mubr.bf16.gmra.mrb[0].mxu0 %v341
  %v512 = vpop.f32.mrb[0].mxu0
  %v513 = vadd.f32 %v380, %v512
  %v514 = vpop.f32.mrb[0].mxu0
  %v515 = vpop.f32.mrb[0].mxu0
  %v516 = vpop.f32.mrb[0].mxu0
  %517 = vdwg.mxu0
  %518 = vst [vmem:[%s6] sm:$0xff] %v513
  // Predicated region
  $region26: #{mlp_forward.1} parent=0 // pred_check
    _
  $region27: #{mlp_forward.1} parent=0 // pred_check_branch
    %520 = sbr.rel (0) target = $region29
  $region28: #{mlp_forward.1} parent=0 // pred_region
    _
  $region29: #{mlp_forward.1} parent=0 // pred_fallthru
    _
  // Predicated region
  $region30: #{mlp_forward.1} parent=0 // pred_check
    _
  $region31: #{mlp_forward.1} parent=0 // pred_check_branch
    %522 = sbr.rel (0) target = $region33
  $region32: #{mlp_forward.1} parent=0 // pred_region
    _
  $region33: #{mlp_forward.1} parent=0 // pred_fallthru
    _

</llo_original>
